<compile_context>
chip_gen: v5e
topology: v5e:2x2
jax: 0.10.0
libtpu: 0.0.40
codegen_flags: <defaults>
</compile_context>

<pallas_src>
import jax
import jax.numpy as jnp
from jax.experimental import pallas as pl
from jax.experimental.pallas import tpu as pltpu

H1, H2 = 512, 256
OUT_LANES = 8      # narrow output slab width (full last dim of the output array)


def _round_up(x, m):
    return ((x + m - 1) // m) * m


def _leaky_relu(x, slope=0.2):
    return jnp.where(x > 0, x, slope * x)


def discriminator_kernel(z_ref, w1_ref, b1_ref, w2_ref, b2_ref, w3_ref, b3_ref,
                         o_ref):
    # Layer 1: cast the raw f32 z tile to bf16 only at the MXU input; f32 acc.
    z = z_ref[...].astype(jnp.bfloat16)
    h = jnp.dot(z, w1_ref[...], preferred_element_type=jnp.float32)
    h = _leaky_relu(h + b1_ref[...])

    # Layer 2: bf16 MXU inputs, f32 accumulation; bias + LeakyReLU in f32 (VPU).
    h = jnp.dot(h.astype(jnp.bfloat16), w2_ref[...],
                preferred_element_type=jnp.float32)
    h = _leaky_relu(h + b2_ref[...])

    # Layer 3 (256 -> 1): MXU matmul against w3 replicated into OUT_LANES
    # identical columns -> the result is already the narrow (bb, 8) output slab.
    logit = jnp.dot(h.astype(jnp.bfloat16), w3_ref[...],
                    preferred_element_type=jnp.float32) + b3_ref[...]

    # Numerically-stable *exact* sigmoid: one exp (EUP) + one f32 divide.
    e = jnp.exp(-jnp.abs(logit))                      # in (0, 1]
    num = jnp.where(logit >= 0, 1.0, e)
    o_ref[...] = (num / (1.0 + e)).astype(o_ref.dtype)


def init_params(key, latent_dim):
    """PyTorch nn.Linear-style init (uniform +-1/sqrt(fan_in)).
    Weights stored as (in_features, out_features); biases as (1, out_features)."""
    dims = [(latent_dim, H1), (H1, H2), (H2, 1)]
    params = []
    for fan_in, fan_out in dims:
        kw, kb, key = jax.random.split(key, 3)
        bound = 1.0 / jnp.sqrt(float(fan_in))
        w = jax.random.uniform(kw, (fan_in, fan_out), jnp.float32, -bound, bound)
        b = jax.random.uniform(kb, (1, fan_out), jnp.float32, -bound, bound)
        params.extend([w, b])
    return tuple(params)


def prepare_params(params):
    """One-time packing for the kernel: cast the MXU weights to bf16 and
    replicate W3/b3 into OUT_LANES identical columns (no contraction-dim pad)."""
    w1, b1, w2, b2, w3, b3 = params
    return (
        w1.astype(jnp.bfloat16),                                       # (latent, 512)
        b1.astype(jnp.float32),                                        # (1, 512)
        w2.astype(jnp.bfloat16),                                       # (512, 256)
        b2.astype(jnp.float32),                                        # (1, 256)
        jnp.broadcast_to(w3.reshape(H2, 1),
                         (H2, OUT_LANES)).astype(jnp.bfloat16),        # (256, 8)
        jnp.broadcast_to(b3.reshape(1, 1),
                         (1, OUT_LANES)).astype(jnp.float32),          # (1, 8)
    )


def discriminator_forward(z, prepared_params, *, block_b=1024):
    """z: (B, latent_dim) f32 -> validity: (B, 1) f32."""
    w1, b1, w2, b2, w3, b3 = prepared_params
    B, k = z.shape

    # Block size: as large as possible (amortize per-step overhead, deep DMA
    # pipeline), but keep >= ~4 grid steps when there is enough work so both
    # v7x TensorCores get batch blocks.
    b8 = _round_up(B, 8)
    bb = min(block_b, b8, max(8, _round_up(b8 // 4, 8)))
    b_pad = _round_up(B, bb)
    if b_pad != B:
        z = jnp.pad(z, ((0, b_pad - B), (0, 0)))
    grid = (b_pad // bb,)

    out = pl.pallas_call(
        discriminator_kernel,
        out_shape=jax.ShapeDtypeStruct((b_pad, OUT_LANES), jnp.float32),
        grid_spec=pltpu.PrefetchScalarGridSpec(
            num_scalar_prefetch=0,
            grid=grid,
            in_specs=[
                pl.BlockSpec((bb, k), lambda i: (i, 0)),           # z tile (raw f32)
                pl.BlockSpec((k, H1), lambda i: (0, 0)),           # W1 (resident)
                pl.BlockSpec((1, H1), lambda i: (0, 0)),           # b1
                pl.BlockSpec((H1, H2), lambda i: (0, 0)),          # W2 (resident)
                pl.BlockSpec((1, H2), lambda i: (0, 0)),           # b2
                pl.BlockSpec((H2, OUT_LANES), lambda i: (0, 0)),   # W3 (8 identical cols)
                pl.BlockSpec((1, OUT_LANES), lambda i: (0, 0)),    # b3
            ],
            out_specs=pl.BlockSpec((bb, OUT_LANES), lambda i: (i, 0)),
        ),
        compiler_params=pltpu.CompilerParams(
            dimension_semantics=("parallel",),   # shard batch across v7x's 2 TCs
            vmem_limit_bytes=32 * 1024 * 1024,   # raise v5e's 16 MiB scoped default
        ),
    )(z, w1, b1, w2, b2, w3, b3)

    # Column 0 of the narrow slab is the validity; padded batch rows are dropped.
    return out[:B, :1]


def reference_forward(z, prepared_params):
    """Pure-JAX reference using identical dtype handling (bf16 MXU inputs, f32 acc)."""
    w1, b1, w2, b2, w3, b3 = prepared_params
    h = jnp.dot(z.astype(jnp.bfloat16), w1, preferred_element_type=jnp.float32) + b1
    h = jnp.where(h > 0, h, 0.2 * h)
    h = jnp.dot(h.astype(jnp.bfloat16), w2, preferred_element_type=jnp.float32) + b2
    h = jnp.where(h > 0, h, 0.2 * h)
    logit = jnp.dot(h.astype(jnp.bfloat16), w3,
                    preferred_element_type=jnp.float32) + b3
    return jax.nn.sigmoid(logit[:, :1])


if __name__ == "__main__":
    key = jax.random.PRNGKey(0)
    kz, kp = jax.random.split(key)

    batch, latent_dim = 8, 64
    z = jax.random.normal(kz, (batch, latent_dim), dtype=jnp.float32)
    params = init_params(kp, latent_dim)
    prepared = prepare_params(params)

    out = discriminator_forward(z, prepared)
    out = jax.block_until_ready(out)

    ref = reference_forward(z, prepared)
    assert out.shape == (batch, 1)
    # Identical bf16/f32 dtype handling in kernel and reference; exact sigmoid.
    assert jnp.allclose(out, ref, atol=2e-3, rtol=2e-3), "mismatch vs JAX reference"

    print("KERNEL_OK")
</pallas_src>

<mosaic_0001>
module attributes {stable_mosaic.version = 11 : i64} {
  func.func @discriminator_kernel(%arg0: i32, %arg1: memref<8x64xf32, #tpu.memory_space<vmem>>, %arg2: memref<64x512xbf16, #tpu.memory_space<vmem>>, %arg3: memref<1x512xf32, #tpu.memory_space<vmem>>, %arg4: memref<512x256xbf16, #tpu.memory_space<vmem>>, %arg5: memref<1x256xf32, #tpu.memory_space<vmem>>, %arg6: memref<256x8xbf16, #tpu.memory_space<vmem>>, %arg7: memref<1x8xf32, #tpu.memory_space<vmem>>, %arg8: memref<8x8xf32, #tpu.memory_space<vmem>>) attributes {dimension_semantics = [#tpu.dimension_semantics<parallel>], iteration_bounds = array<i64: 1>, scalar_prefetch = 0 : i64, scratch_operands = 0 : i64, tpu.core_type = #tpu.core_type<tc>, window_params = [{transform_indices = @transform_0, window_bounds = array<i64: 8, 64>}, {pipeline_mode = #tpu.pipeline_mode<synchronous>, transform_indices = @transform_1, window_bounds = array<i64: 64, 512>}, {pipeline_mode = #tpu.pipeline_mode<synchronous>, transform_indices = @transform_2, window_bounds = array<i64: 1, 512>}, {pipeline_mode = #tpu.pipeline_mode<synchronous>, transform_indices = @transform_3, window_bounds = array<i64: 512, 256>}, {pipeline_mode = #tpu.pipeline_mode<synchronous>, transform_indices = @transform_4, window_bounds = array<i64: 1, 256>}, {pipeline_mode = #tpu.pipeline_mode<synchronous>, transform_indices = @transform_5, window_bounds = array<i64: 256, 8>}, {pipeline_mode = #tpu.pipeline_mode<synchronous>, transform_indices = @transform_6, window_bounds = array<i64: 1, 8>}, {transform_indices = @transform_7, window_bounds = array<i64: 8, 8>}]} {
    %c0 = arith.constant 0 : index
    %c0_0 = arith.constant 0 : index
    %0 = vector.load %arg1[%c0, %c0_0] : memref<8x64xf32, #tpu.memory_space<vmem>>, vector<8x64xf32>
    %1 = arith.truncf %0 : vector<8x64xf32> to vector<8x64xbf16>
    %c0_1 = arith.constant 0 : index
    %c0_2 = arith.constant 0 : index
    %2 = vector.load %arg2[%c0_1, %c0_2] : memref<64x512xbf16, #tpu.memory_space<vmem>>, vector<64x512xbf16>
    %cst = arith.constant dense<0.000000e+00> : vector<8x512xf32>
    %3 = tpu.matmul %1, %2, %cst {dimension_numbers = #tpu.dot_dimension_numbers<[1], [0], [0], [1], [0, 0, 1, 1], [], []>} : vector<8x64xbf16>, vector<64x512xbf16>, vector<8x512xf32> -> vector<8x512xf32>
    %c0_3 = arith.constant 0 : index
    %c0_4 = arith.constant 0 : index
    %4 = vector.load %arg3[%c0_3, %c0_4] : memref<1x512xf32, #tpu.memory_space<vmem>>, vector<1x512xf32>
    %5 = vector.broadcast %4 : vector<1x512xf32> to vector<8x512xf32>
    %6 = arith.addf %3, %5 : vector<8x512xf32>
    %cst_5 = arith.constant 0.000000e+00 : f32
    %7 = vector.broadcast %cst_5 : f32 to vector<8x512xf32>
    %8 = arith.cmpf ogt, %6, %7 : vector<8x512xf32>
    %cst_6 = arith.constant 2.000000e-01 : f32
    %9 = vector.broadcast %cst_6 : f32 to vector<8x512xf32>
    %10 = arith.mulf %9, %6 : vector<8x512xf32>
    %11 = arith.select %8, %6, %10 : vector<8x512xi1>, vector<8x512xf32>
    %12 = arith.truncf %11 : vector<8x512xf32> to vector<8x512xbf16>
    %c0_7 = arith.constant 0 : index
    %c0_8 = arith.constant 0 : index
    %13 = vector.load %arg4[%c0_7, %c0_8] : memref<512x256xbf16, #tpu.memory_space<vmem>>, vector<512x256xbf16>
    %cst_9 = arith.constant dense<0.000000e+00> : vector<8x256xf32>
    %14 = tpu.matmul %12, %13, %cst_9 {dimension_numbers = #tpu.dot_dimension_numbers<[1], [0], [0], [1], [0, 0, 1, 1], [], []>} : vector<8x512xbf16>, vector<512x256xbf16>, vector<8x256xf32> -> vector<8x256xf32>
    %c0_10 = arith.constant 0 : index
    %c0_11 = arith.constant 0 : index
    %15 = vector.load %arg5[%c0_10, %c0_11] : memref<1x256xf32, #tpu.memory_space<vmem>>, vector<1x256xf32>
    %16 = vector.broadcast %15 : vector<1x256xf32> to vector<8x256xf32>
    %17 = arith.addf %14, %16 : vector<8x256xf32>
    %cst_12 = arith.constant 0.000000e+00 : f32
    %18 = vector.broadcast %cst_12 : f32 to vector<8x256xf32>
    %19 = arith.cmpf ogt, %17, %18 : vector<8x256xf32>
    %cst_13 = arith.constant 2.000000e-01 : f32
    %20 = vector.broadcast %cst_13 : f32 to vector<8x256xf32>
    %21 = arith.mulf %20, %17 : vector<8x256xf32>
    %22 = arith.select %19, %17, %21 : vector<8x256xi1>, vector<8x256xf32>
    %23 = arith.truncf %22 : vector<8x256xf32> to vector<8x256xbf16>
    %c0_14 = arith.constant 0 : index
    %c0_15 = arith.constant 0 : index
    %24 = vector.load %arg6[%c0_14, %c0_15] : memref<256x8xbf16, #tpu.memory_space<vmem>>, vector<256x8xbf16>
    %cst_16 = arith.constant dense<0.000000e+00> : vector<8x8xf32>
    %25 = tpu.matmul %23, %24, %cst_16 {dimension_numbers = #tpu.dot_dimension_numbers<[1], [0], [0], [1], [0, 0, 1, 1], [], []>} : vector<8x256xbf16>, vector<256x8xbf16>, vector<8x8xf32> -> vector<8x8xf32>
    %c0_17 = arith.constant 0 : index
    %c0_18 = arith.constant 0 : index
    %26 = vector.load %arg7[%c0_17, %c0_18] : memref<1x8xf32, #tpu.memory_space<vmem>>, vector<1x8xf32>
    %27 = vector.broadcast %26 : vector<1x8xf32> to vector<8x8xf32>
    %28 = arith.addf %25, %27 : vector<8x8xf32>
    %29 = math.absf %28 : vector<8x8xf32>
    %cst_19 = arith.constant 0.000000e+00 : f32
    %30 = vector.broadcast %cst_19 : f32 to vector<8x8xf32>
    %31 = arith.subf %30, %29 : vector<8x8xf32>
    %32 = math.exp %31 : vector<8x8xf32>
    %cst_20 = arith.constant 0.000000e+00 : f32
    %33 = vector.broadcast %cst_20 : f32 to vector<8x8xf32>
    %34 = arith.cmpf oge, %28, %33 : vector<8x8xf32>
    %cst_21 = arith.constant 1.000000e+00 : f32
    %35 = vector.broadcast %cst_21 : f32 to vector<8x8xf32>
    %36 = arith.select %34, %35, %32 : vector<8x8xi1>, vector<8x8xf32>
    %cst_22 = arith.constant 1.000000e+00 : f32
    %37 = vector.broadcast %cst_22 : f32 to vector<8x8xf32>
    %38 = arith.addf %37, %32 : vector<8x8xf32>
    %39 = arith.divf %36, %38 : vector<8x8xf32>
    %c0_23 = arith.constant 0 : index
    %c0_24 = arith.constant 0 : index
    %40 = vector.load %arg8[%c0_23, %c0_24] : memref<8x8xf32, #tpu.memory_space<vmem>>, vector<8x8xf32>
    tpu.vector_store %arg8[%c0_23, %c0_24], %39 {strides = array<i32>} : memref<8x8xf32, #tpu.memory_space<vmem>>, vector<8x8xf32>,
    return
  }
  func.func @transform_0(%arg0: i32) -> (i32, i32) {
    %c0_i32 = arith.constant 0 : i32
    %c0_i32_0 = arith.constant 0 : i32
    return %arg0, %c0_i32 : i32, i32
  }
  func.func @transform_1(%arg0: i32) -> (i32, i32) {
    %c0_i32 = arith.constant 0 : i32
    %c0_i32_0 = arith.constant 0 : i32
    %c0_i32_1 = arith.constant 0 : i32
    return %c0_i32, %c0_i32_0 : i32, i32
  }
  func.func @transform_2(%arg0: i32) -> (i32, i32) {
    %c0_i32 = arith.constant 0 : i32
    %c0_i32_0 = arith.constant 0 : i32
    %c0_i32_1 = arith.constant 0 : i32
    return %c0_i32, %c0_i32_0 : i32, i32
  }
  func.func @transform_3(%arg0: i32) -> (i32, i32) {
    %c0_i32 = arith.constant 0 : i32
    %c0_i32_0 = arith.constant 0 : i32
    %c0_i32_1 = arith.constant 0 : i32
    return %c0_i32, %c0_i32_0 : i32, i32
  }
  func.func @transform_4(%arg0: i32) -> (i32, i32) {
    %c0_i32 = arith.constant 0 : i32
    %c0_i32_0 = arith.constant 0 : i32
    %c0_i32_1 = arith.constant 0 : i32
    return %c0_i32, %c0_i32_0 : i32, i32
  }
  func.func @transform_5(%arg0: i32) -> (i32, i32) {
    %c0_i32 = arith.constant 0 : i32
    %c0_i32_0 = arith.constant 0 : i32
    %c0_i32_1 = arith.constant 0 : i32
    return %c0_i32, %c0_i32_0 : i32, i32
  }
  func.func @transform_6(%arg0: i32) -> (i32, i32) {
    %c0_i32 = arith.constant 0 : i32
    %c0_i32_0 = arith.constant 0 : i32
    %c0_i32_1 = arith.constant 0 : i32
    return %c0_i32, %c0_i32_0 : i32, i32
  }
  func.func @transform_7(%arg0: i32) -> (i32, i32) {
    %c0_i32 = arith.constant 0 : i32
    %c0_i32_0 = arith.constant 0 : i32
    return %arg0, %c0_i32 : i32, i32
  }
}

</mosaic_0001>

<llo_original>
// kernel: tpu_custom_call.1
$region0: #{tpu_custom_call.1}
  #allocation0 [shape = 'u32[]', space=smem, size = 0x4, offset = 0x4, fixed_abs, tag = 'smem constant byte address 0x4 - core index']
  #allocation1 [shape = 'u32[72,128]{1,0:T(1,128)}', space=vmem, size = 0x9000, scoped, tag = 'internal scratch']
  %s0 = inlined_call_operand.vmem [shape: f32[8,64], index: 0, kind: input, shape index: {}]
  %s1 = inlined_call_operand.vmem [shape: bf16[64,512], index: 1, kind: input, shape index: {}]
  %s2 = inlined_call_operand.hbm [shape: f32[1,512], index: 2, kind: input, shape index: {}]
  %s3 = inlined_call_operand.hbm [shape: bf16[512,256], index: 3, kind: input, shape index: {}]
  %s4 = inlined_call_operand.vmem [shape: f32[1,256], index: 4, kind: input, shape index: {}]
  %s5 = inlined_call_operand.vmem [shape: bf16[256,8], index: 5, kind: input, shape index: {}]
  %s6 = inlined_call_operand.vmem [shape: f32[1,8], index: 6, kind: input, shape index: {}]
  %s7 = inlined_call_operand.hbm [shape: f32[8,8], index: 7, kind: output, shape index: {}]
  %s8 = sld [smem:[#allocation0]]
  $region46: #{tpu_custom_call.1} parent=0
    _
  %s10 = ssub.s32 1, %s8
  %s11 = scalar_select 0, %s10, %s8
  $region1: #{tpu_custom_call.1} parent=0
    #allocation2 [shape = 'u8[2048]{0}', space=vmem, size = 0x800, scoped, tag = 'input window, operand 2, single buffered']
    #allocation3 [shape = 's32[1]{0}', space=sflag, size = 0x4, scoped, tag = 'scoped memory for tpu_custom_call.1']
    #allocation4 [shape = 's32[1]{0}', space=sflag, size = 0x4, scoped, tag = 'scoped memory for tpu_custom_call.1']
    #allocation5 [shape = 'u8[262144]{0}', space=vmem, size = 0x40000, scoped, tag = 'input window, operand 3, single buffered']
    #allocation6 [shape = 's32[1]{0}', space=sflag, size = 0x4, scoped, tag = 'scoped memory for tpu_custom_call.1']
    #allocation7 [shape = 'u8[4096]{0}', space=vmem, size = 0x1000, scoped, tag = 'output window, operand 0, single buffered']
    %12 = vsyncpa [#allocation3], 0
    %13 = vsyncpa [#allocation6], 0
    %14 = vsyncpa [#allocation4], 0
    // Predicated region
    $region2: #{tpu_custom_call.1} parent=1 // pred_check
      _
    $region3: #{tpu_custom_call.1} parent=1 // pred_check_branch
      %16 = sbr.rel (0) target = $region5
    $region4: #{tpu_custom_call.1} parent=1 // pred_region
      _
    $region5: #{tpu_custom_call.1} parent=1 // pred_fallthru
      _
    // Predicated region
    $region6: #{tpu_custom_call.1} parent=1 // pred_check
      _
    $region7: #{tpu_custom_call.1} parent=1 // pred_check_branch
      %18 = sbr.rel (0) target = $region9
    $region8: #{tpu_custom_call.1} parent=1 // pred_region
      _
    $region9: #{tpu_custom_call.1} parent=1 // pred_fallthru
      _
    // Predicated region
    $region10: #{tpu_custom_call.1} parent=1 // pred_check
      _
    $region11: #{tpu_custom_call.1} parent=1 // pred_check_branch
      %20 = sbr.rel (0) target = $region13
    $region12: #{tpu_custom_call.1} parent=1 // pred_region
      %22 = vsyncadd [#allocation3], 0
      %s24 = sshll.u32 %s2, 4
      %s25 = int_to_ptr.hbm [resolvable:$true] %s24
      %s26 = sshll.u32 [#allocation2], 4
      %s27 = int_to_ptr.vmem [resolvable:$true] %s26
      %29 = dma.hbm_to_vmem [thread:$0]  %s25, 64, %s27, [#allocation3]
    $region13: #{tpu_custom_call.1} parent=1 // pred_fallthru
      _
    // Predicated region
    $region14: #{tpu_custom_call.1} parent=1 // pred_check
      _
    $region15: #{tpu_custom_call.1} parent=1 // pred_check_branch
      %31 = sbr.rel (0) target = $region17
    $region16: #{tpu_custom_call.1} parent=1 // pred_region
      %33 = vsyncadd [#allocation6], 0
      %s34 = sshll.u32 %s3, 4
      %s35 = int_to_ptr.hbm [resolvable:$true] %s34
      %s36 = sshll.u32 [#allocation5], 4
      %s37 = int_to_ptr.vmem [resolvable:$true] %s36
      %42 = dma.hbm_to_vmem [thread:$0]  %s35, 8192, %s37, [#allocation6], 128, 128, 8
    $region17: #{tpu_custom_call.1} parent=1 // pred_fallthru
      _
    // Predicated region
    $region18: #{tpu_custom_call.1} parent=1 // pred_check
      _
    $region19: #{tpu_custom_call.1} parent=1 // pred_check_branch
      %44 = sbr.rel (0) target = $region21
    $region20: #{tpu_custom_call.1} parent=1 // pred_region
      _
    $region21: #{tpu_custom_call.1} parent=1 // pred_fallthru
      _
    // Predicated region
    $region22: #{tpu_custom_call.1} parent=1 // pred_check
      _
    $region23: #{tpu_custom_call.1} parent=1 // pred_check_branch
      %46 = sbr.rel (0) target = $region25
    $region24: #{tpu_custom_call.1} parent=1 // pred_region
      _
    $region25: #{tpu_custom_call.1} parent=1 // pred_fallthru
      _
    // Predicated region
    $region26: #{tpu_custom_call.1} parent=1 // pred_check
      _
    $region27: #{tpu_custom_call.1} parent=1 // pred_check_branch
      %48 = sbr.rel (0) target = $region29
    $region28: #{tpu_custom_call.1} parent=1 // pred_region
      _
    $region29: #{tpu_custom_call.1} parent=1 // pred_fallthru
      _
    // Predicated region
    $region30: #{tpu_custom_call.1} parent=1 // pred_check
      _
    $region31: #{tpu_custom_call.1} parent=1 // pred_check_branch
      %50 = sbr.rel (0) target = $region33
    $region32: #{tpu_custom_call.1} parent=1 // pred_region
      %52 = dma.done [#allocation3], 64
    $region33: #{tpu_custom_call.1} parent=1 // pred_fallthru
      _
    // Predicated region
    $region34: #{tpu_custom_call.1} parent=1 // pred_check
      _
    $region35: #{tpu_custom_call.1} parent=1 // pred_check_branch
      %54 = sbr.rel (0) target = $region37
    $region36: #{tpu_custom_call.1} parent=1 // pred_region
      %56 = dma.done [#allocation6], 8192
    $region37: #{tpu_custom_call.1} parent=1 // pred_fallthru
      _
    %v58 = vld [vmem:[%s0] sm:$0xff]
    %v59 = vpack.c.bf16 %v58, %v58
    %v60 = vld [vmem:[%s1] sm:$0xff]
    %v61 = vld [vmem:[%s1 + $0x8] sm:$0xff]
    %v62 = vld [vmem:[%s1 + $0x10] sm:$0xff]
    %v63 = vld [vmem:[%s1 + $0x18] sm:$0xff]
    %v64 = vld [vmem:[%s1 + $0x20] sm:$0xff]
    %v65 = vld [vmem:[%s1 + $0x28] sm:$0xff]
    %v66 = vld [vmem:[%s1 + $0x30] sm:$0xff]
    %v67 = vld [vmem:[%s1 + $0x38] sm:$0xff]
    %v68 = vld [vmem:[%s1 + $0x40] sm:$0xff]
    %v69 = vld [vmem:[%s1 + $0x48] sm:$0xff]
    %v70 = vld [vmem:[%s1 + $0x50] sm:$0xff]
    %v71 = vld [vmem:[%s1 + $0x58] sm:$0xff]
    %v72 = vld [vmem:[%s1 + $0x60] sm:$0xff]
    %v73 = vld [vmem:[%s1 + $0x68] sm:$0xff]
    %v74 = vld [vmem:[%s1 + $0x70] sm:$0xff]
    %v75 = vld [vmem:[%s1 + $0x78] sm:$0xff]
    %v76 = vld [vmem:[#allocation2] sm:$0xf]
    %v78 = vperm.slane %v76, 0
    %v79 = vperm.slane %v76, 1
    %v80 = vperm.slane %v76, 2
    %v81 = vperm.slane %v76, 3
    %v102 = vunpack.c.l.b16 %v60
    %v103 = vunpack.c.h.b16 %v60
    %v104 = vunpack.c.l.b16 %v61
    %v105 = vunpack.c.h.b16 %v61
    %v106 = vunpack.c.l.b16 %v62
    %v107 = vunpack.c.h.b16 %v62
    %v108 = vunpack.c.l.b16 %v63
    %v109 = vunpack.c.h.b16 %v63
    %v110 = vunpack.c.l.b16 %v64
    %v111 = vunpack.c.h.b16 %v64
    %v112 = vunpack.c.l.b16 %v65
    %v113 = vunpack.c.h.b16 %v65
    %v114 = vunpack.c.l.b16 %v66
    %v115 = vunpack.c.h.b16 %v66
    %v116 = vunpack.c.l.b16 %v67
    %v117 = vunpack.c.h.b16 %v67
    %v118 = vunpack.c.l.b16 %v68
    %v119 = vunpack.c.h.b16 %v68
    %v120 = vunpack.c.l.b16 %v69
    %v121 = vunpack.c.h.b16 %v69
    %v122 = vunpack.c.l.b16 %v70
    %v123 = vunpack.c.h.b16 %v70
    %v124 = vunpack.c.l.b16 %v71
    %v125 = vunpack.c.h.b16 %v71
    %v126 = vunpack.c.l.b16 %v72
    %v127 = vunpack.c.h.b16 %v72
    %v128 = vunpack.c.l.b16 %v73
    %v129 = vunpack.c.h.b16 %v73
    %v130 = vunpack.c.l.b16 %v74
    %v131 = vunpack.c.h.b16 %v74
    %v132 = vunpack.c.l.b16 %v75
    %v133 = vunpack.c.h.b16 %v75
    %v134 = vpack.c.b16 %v106, %v102
    %v135 = vpack.c.b16 %v107, %v103
    %v136 = vpack.c.b16 %v108, %v104
    %v137 = vpack.c.b16 %v109, %v105
    %v138 = vpack.c.b16 %v114, %v110
    %v139 = vpack.c.b16 %v115, %v111
    %v140 = vpack.c.b16 %v116, %v112
    %v141 = vpack.c.b16 %v117, %v113
    %v142 = vpack.c.b16 %v122, %v118
    %v143 = vpack.c.b16 %v123, %v119
    %v144 = vpack.c.b16 %v124, %v120
    %v145 = vpack.c.b16 %v125, %v121
    %v146 = vpack.c.b16 %v130, %v126
    %v147 = vpack.c.b16 %v131, %v127
    %v148 = vpack.c.b16 %v132, %v128
    %v149 = vpack.c.b16 %v133, %v129
    %vm166 = vcmask 523264
    %v168 = vsel %vm166, %v59, 0
    %170 = vmatpush.bf16.msra.mxu0 0
    %171 = vmatpush.bf16.msra.mxu0 0
    %172 = vmatpush.bf16.msra.mxu0 0
    %173 = vmatpush.bf16.msra.mxu0 0
    %174 = vmatpush.bf16.msra.mxu0 %v146
    %175 = vmatpush.bf16.msra.mxu0 %v142
    %176 = vmatpush.bf16.msra.mxu0 %v138
    %177 = vmatpush.bf16.msra.mxu0 %v134
    %178 = vmatmul.bf16.gmra.mxu0 %v168
    %v179 = vpop.f32.mrf.mxu0
    %v180 = vadd.f32 %v78, %v179
    %v181 = vpop.f32.mrf.mxu0
    %182 = vdwg.mxu0
    %183 = vmatpush.bf16.msra.mxu0 0
    %184 = vmatpush.bf16.msra.mxu0 0
    %185 = vmatpush.bf16.msra.mxu0 0
    %186 = vmatpush.bf16.msra.mxu0 0
    %187 = vmatpush.bf16.msra.mxu0 %v147
    %188 = vmatpush.bf16.msra.mxu0 %v143
    %189 = vmatpush.bf16.msra.mxu0 %v139
    %190 = vmatpush.bf16.msra.mxu0 %v135
    %191 = vmatmul.bf16.gmra.mxu0 %v168
    %v192 = vpop.f32.mrf.mxu0
    %v193 = vadd.f32 %v79, %v192
    %v194 = vpop.f32.mrf.mxu0
    %195 = vdwg.mxu0
    %196 = vmatpush.bf16.msra.mxu0 0
    %197 = vmatpush.bf16.msra.mxu0 0
    %198 = vmatpush.bf16.msra.mxu0 0
    %199 = vmatpush.bf16.msra.mxu0 0
    %200 = vmatpush.bf16.msra.mxu0 %v148
    %201 = vmatpush.bf16.msra.mxu0 %v144
    %202 = vmatpush.bf16.msra.mxu0 %v140
    %203 = vmatpush.bf16.msra.mxu0 %v136
    %204 = vmatmul.bf16.gmra.mxu0 %v168
    %v205 = vpop.f32.mrf.mxu0
    %v206 = vadd.f32 %v80, %v205
    %v207 = vpop.f32.mrf.mxu0
    %208 = vdwg.mxu0
    %209 = vmatpush.bf16.msra.mxu0 0
    %210 = vmatpush.bf16.msra.mxu0 0
    %211 = vmatpush.bf16.msra.mxu0 0
    %212 = vmatpush.bf16.msra.mxu0 0
    %213 = vmatpush.bf16.msra.mxu0 %v149
    %214 = vmatpush.bf16.msra.mxu0 %v145
    %215 = vmatpush.bf16.msra.mxu0 %v141
    %216 = vmatpush.bf16.msra.mxu0 %v137
    %217 = vmatmul.bf16.gmra.mxu0 %v168
    %v218 = vpop.f32.mrf.mxu0
    %v219 = vadd.f32 %v81, %v218
    %v220 = vpop.f32.mrf.mxu0
    %221 = vdwg.mxu0
    %vm222 = vcmp.gt.f32.partialorder %v180, 0.0
    %vm223 = vcmp.gt.f32.partialorder %v193, 0.0
    %vm224 = vcmp.gt.f32.partialorder %v206, 0.0
    %vm225 = vcmp.gt.f32.partialorder %v219, 0.0
    %v226 = vmul.f32 %v180, 0.2
    %v227 = vmul.f32 %v193, 0.2
    %v228 = vmul.f32 %v206, 0.2
    %v229 = vmul.f32 %v219, 0.2
    %v230 = vsel %vm222, %v180, %v226
    %v231 = vsel %vm223, %v193, %v227
    %v232 = vsel %vm224, %v206, %v228
    %v233 = vsel %vm225, %v219, %v229
    %v234 = vpack.c.bf16 %v230, %v230
    %v235 = vpack.c.bf16 %v231, %v231
    %v236 = vpack.c.bf16 %v232, %v232
    %v237 = vpack.c.bf16 %v233, %v233
    %v238 = vld [vmem:[#allocation5] sm:$0xff]
    %v239 = vld [vmem:[#allocation5 + $0x8] sm:$0xff]
    %v240 = vld [vmem:[#allocation5 + $0x10] sm:$0xff]
    %v241 = vld [vmem:[#allocation5 + $0x18] sm:$0xff]
    %v242 = vld [vmem:[#allocation5 + $0x20] sm:$0xff]
    %v243 = vld [vmem:[#allocation5 + $0x28] sm:$0xff]
    %v244 = vld [vmem:[#allocation5 + $0x30] sm:$0xff]
    %v245 = vld [vmem:[#allocation5 + $0x38] sm:$0xff]
    %v246 = vld [vmem:[#allocation5 + $0x40] sm:$0xff]
    %v247 = vld [vmem:[#allocation5 + $0x48] sm:$0xff]
    %v248 = vld [vmem:[#allocation5 + $0x50] sm:$0xff]
    %v249 = vld [vmem:[#allocation5 + $0x58] sm:$0xff]
    %v250 = vld [vmem:[#allocation5 + $0x60] sm:$0xff]
    %v251 = vld [vmem:[#allocation5 + $0x68] sm:$0xff]
    %v252 = vld [vmem:[#allocation5 + $0x70] sm:$0xff]
    %v253 = vld [vmem:[#allocation5 + $0x78] sm:$0xff]
    %v254 = vld [vmem:[#allocation5 + $0x80] sm:$0xff]
    %v255 = vld [vmem:[#allocation5 + $0x88] sm:$0xff]
    %v256 = vld [vmem:[#allocation5 + $0x90] sm:$0xff]
    %v257 = vld [vmem:[#allocation5 + $0x98] sm:$0xff]
    %v258 = vld [vmem:[#allocation5 + $0xa0] sm:$0xff]
    %v259 = vld [vmem:[#allocation5 + $0xa8] sm:$0xff]
    %v260 = vld [vmem:[#allocation5 + $0xb0] sm:$0xff]
    %v261 = vld [vmem:[#allocation5 + $0xb8] sm:$0xff]
    %v262 = vld [vmem:[#allocation5 + $0xc0] sm:$0xff]
    %v263 = vld [vmem:[#allocation5 + $0xc8] sm:$0xff]
    %v264 = vld [vmem:[#allocation5 + $0xd0] sm:$0xff]
    %v265 = vld [vmem:[#allocation5 + $0xd8] sm:$0xff]
    %v266 = vld [vmem:[#allocation5 + $0xe0] sm:$0xff]
    %v267 = vld [vmem:[#allocation5 + $0xe8] sm:$0xff]
    %v268 = vld [vmem:[#allocation5 + $0xf0] sm:$0xff]
    %v269 = vld [vmem:[#allocation5 + $0xf8] sm:$0xff]
    %v270 = vld [vmem:[#allocation5 + $0x100] sm:$0xff]
    %v271 = vld [vmem:[#allocation5 + $0x108] sm:$0xff]
    %v272 = vld [vmem:[#allocation5 + $0x110] sm:$0xff]
    %v273 = vld [vmem:[#allocation5 + $0x118] sm:$0xff]
    %v274 = vld [vmem:[#allocation5 + $0x120] sm:$0xff]
    %v275 = vld [vmem:[#allocation5 + $0x128] sm:$0xff]
    %v276 = vld [vmem:[#allocation5 + $0x130] sm:$0xff]
    %v277 = vld [vmem:[#allocation5 + $0x138] sm:$0xff]
    %v278 = vld [vmem:[#allocation5 + $0x140] sm:$0xff]
    %v279 = vld [vmem:[#allocation5 + $0x148] sm:$0xff]
    %v280 = vld [vmem:[#allocation5 + $0x150] sm:$0xff]
    %v281 = vld [vmem:[#allocation5 + $0x158] sm:$0xff]
    %v282 = vld [vmem:[#allocation5 + $0x160] sm:$0xff]
    %v283 = vld [vmem:[#allocation5 + $0x168] sm:$0xff]
    %v284 = vld [vmem:[#allocation5 + $0x170] sm:$0xff]
    %v285 = vld [vmem:[#allocation5 + $0x178] sm:$0xff]
    %v286 = vld [vmem:[#allocation5 + $0x180] sm:$0xff]
    %v287 = vld [vmem:[#allocation5 + $0x188] sm:$0xff]
    %v288 = vld [vmem:[#allocation5 + $0x190] sm:$0xff]
    %v289 = vld [vmem:[#allocation5 + $0x198] sm:$0xff]
    %v290 = vld [vmem:[#allocation5 + $0x1a0] sm:$0xff]
    %v291 = vld [vmem:[#allocation5 + $0x1a8] sm:$0xff]
    %v292 = vld [vmem:[#allocation5 + $0x1b0] sm:$0xff]
    %v293 = vld [vmem:[#allocation5 + $0x1b8] sm:$0xff]
    %v294 = vld [vmem:[#allocation5 + $0x1c0] sm:$0xff]
    %v295 = vld [vmem:[#allocation5 + $0x1c8] sm:$0xff]
    %v296 = vld [vmem:[#allocation5 + $0x1d0] sm:$0xff]
    %v297 = vld [vmem:[#allocation5 + $0x1d8] sm:$0xff]
    %v298 = vld [vmem:[#allocation5 + $0x1e0] sm:$0xff]
    %v299 = vld [vmem:[#allocation5 + $0x1e8] sm:$0xff]
    %v300 = vld [vmem:[#allocation5 + $0x1f0] sm:$0xff]
    %v301 = vld [vmem:[#allocation5 + $0x1f8] sm:$0xff]
    %v302 = vld [vmem:[%s4] sm:$0x3]
    %v304 = vperm.slane %v302, 0
    %v305 = vperm.slane %v302, 1
    %v372 = vunpack.c.l.b16 %v238
    %v373 = vunpack.c.h.b16 %v238
    %v374 = vunpack.c.l.b16 %v239
    %v375 = vunpack.c.h.b16 %v239
    %v376 = vunpack.c.l.b16 %v240
    %v377 = vunpack.c.h.b16 %v240
    %v378 = vunpack.c.l.b16 %v241
    %v379 = vunpack.c.h.b16 %v241
    %v380 = vunpack.c.l.b16 %v242
    %v381 = vunpack.c.h.b16 %v242
    %v382 = vunpack.c.l.b16 %v243
    %v383 = vunpack.c.h.b16 %v243
    %v384 = vunpack.c.l.b16 %v244
    %v385 = vunpack.c.h.b16 %v244
    %v386 = vunpack.c.l.b16 %v245
    %v387 = vunpack.c.h.b16 %v245
    %v388 = vunpack.c.l.b16 %v246
    %v389 = vunpack.c.h.b16 %v246
    %v390 = vunpack.c.l.b16 %v247
    %v391 = vunpack.c.h.b16 %v247
    %v392 = vunpack.c.l.b16 %v248
    %v393 = vunpack.c.h.b16 %v248
    %v394 = vunpack.c.l.b16 %v249
    %v395 = vunpack.c.h.b16 %v249
    %v396 = vunpack.c.l.b16 %v250
    %v397 = vunpack.c.h.b16 %v250
    %v398 = vunpack.c.l.b16 %v251
    %v399 = vunpack.c.h.b16 %v251
    %v400 = vunpack.c.l.b16 %v252
    %v401 = vunpack.c.h.b16 %v252
    %v402 = vunpack.c.l.b16 %v253
    %v403 = vunpack.c.h.b16 %v253
    %v404 = vunpack.c.l.b16 %v254
    %v405 = vunpack.c.h.b16 %v254
    %v406 = vunpack.c.l.b16 %v255
    %v407 = vunpack.c.h.b16 %v255
    %v408 = vunpack.c.l.b16 %v256
    %v409 = vunpack.c.h.b16 %v256
    %v410 = vunpack.c.l.b16 %v257
    %v411 = vunpack.c.h.b16 %v257
    %v412 = vunpack.c.l.b16 %v258
    %v413 = vunpack.c.h.b16 %v258
    %v414 = vunpack.c.l.b16 %v259
    %v415 = vunpack.c.h.b16 %v259
    %v416 = vunpack.c.l.b16 %v260
    %v417 = vunpack.c.h.b16 %v260
    %v418 = vunpack.c.l.b16 %v261
    %v419 = vunpack.c.h.b16 %v261
    %v420 = vunpack.c.l.b16 %v262
    %v421 = vunpack.c.h.b16 %v262
    %v422 = vunpack.c.l.b16 %v263
    %v423 = vunpack.c.h.b16 %v263
    %v424 = vunpack.c.l.b16 %v264
    %v425 = vunpack.c.h.b16 %v264
    %v426 = vunpack.c.l.b16 %v265
    %v427 = vunpack.c.h.b16 %v265
    %v428 = vunpack.c.l.b16 %v266
    %v429 = vunpack.c.h.b16 %v266
    %v430 = vunpack.c.l.b16 %v267
    %v431 = vunpack.c.h.b16 %v267
    %v432 = vunpack.c.l.b16 %v268
    %v433 = vunpack.c.h.b16 %v268
    %v434 = vunpack.c.l.b16 %v269
    %v435 = vunpack.c.h.b16 %v269
    %v436 = vunpack.c.l.b16 %v270
    %v437 = vunpack.c.h.b16 %v270
    %v438 = vunpack.c.l.b16 %v271
    %v439 = vunpack.c.h.b16 %v271
    %v440 = vunpack.c.l.b16 %v272
    %v441 = vunpack.c.h.b16 %v272
    %v442 = vunpack.c.l.b16 %v273
    %v443 = vunpack.c.h.b16 %v273
    %v444 = vunpack.c.l.b16 %v274
    %v445 = vunpack.c.h.b16 %v274
    %v446 = vunpack.c.l.b16 %v275
    %v447 = vunpack.c.h.b16 %v275
    %v448 = vunpack.c.l.b16 %v276
    %v449 = vunpack.c.h.b16 %v276
    %v450 = vunpack.c.l.b16 %v277
    %v451 = vunpack.c.h.b16 %v277
    %v452 = vunpack.c.l.b16 %v278
    %v453 = vunpack.c.h.b16 %v278
    %v454 = vunpack.c.l.b16 %v279
    %v455 = vunpack.c.h.b16 %v279
    %v456 = vunpack.c.l.b16 %v280
    %v457 = vunpack.c.h.b16 %v280
    %v458 = vunpack.c.l.b16 %v281
    %v459 = vunpack.c.h.b16 %v281
    %v460 = vunpack.c.l.b16 %v282
    %v461 = vunpack.c.h.b16 %v282
    %v462 = vunpack.c.l.b16 %v283
    %v463 = vunpack.c.h.b16 %v283
    %v464 = vunpack.c.l.b16 %v284
    %v465 = vunpack.c.h.b16 %v284
    %v466 = vunpack.c.l.b16 %v285
    %v467 = vunpack.c.h.b16 %v285
    %v468 = vunpack.c.l.b16 %v286
    %v469 = vunpack.c.h.b16 %v286
    %v470 = vunpack.c.l.b16 %v287
    %v471 = vunpack.c.h.b16 %v287
    %v472 = vunpack.c.l.b16 %v288
    %v473 = vunpack.c.h.b16 %v288
    %v474 = vunpack.c.l.b16 %v289
    %v475 = vunpack.c.h.b16 %v289
    %v476 = vunpack.c.l.b16 %v290
    %v477 = vunpack.c.h.b16 %v290
    %v478 = vunpack.c.l.b16 %v291
    %v479 = vunpack.c.h.b16 %v291
    %v480 = vunpack.c.l.b16 %v292
    %v481 = vunpack.c.h.b16 %v292
    %v482 = vunpack.c.l.b16 %v293
    %v483 = vunpack.c.h.b16 %v293
    %v484 = vunpack.c.l.b16 %v294
    %v485 = vunpack.c.h.b16 %v294
    %v486 = vunpack.c.l.b16 %v295
    %v487 = vunpack.c.h.b16 %v295
    %v488 = vunpack.c.l.b16 %v296
    %v489 = vunpack.c.h.b16 %v296
    %v490 = vunpack.c.l.b16 %v297
    %v491 = vunpack.c.h.b16 %v297
    %v492 = vunpack.c.l.b16 %v298
    %v493 = vunpack.c.h.b16 %v298
    %v494 = vunpack.c.l.b16 %v299
    %v495 = vunpack.c.h.b16 %v299
    %v496 = vunpack.c.l.b16 %v300
    %v497 = vunpack.c.h.b16 %v300
    %v498 = vunpack.c.l.b16 %v301
    %v499 = vunpack.c.h.b16 %v301
    %v500 = vpack.c.b16 %v374, %v372
    %v501 = vpack.c.b16 %v375, %v373
    %v502 = vpack.c.b16 %v378, %v376
    %v503 = vpack.c.b16 %v379, %v377
    %v504 = vpack.c.b16 %v382, %v380
    %v505 = vpack.c.b16 %v383, %v381
    %v506 = vpack.c.b16 %v386, %v384
    %v507 = vpack.c.b16 %v387, %v385
    %v508 = vpack.c.b16 %v390, %v388
    %v509 = vpack.c.b16 %v391, %v389
    %v510 = vpack.c.b16 %v394, %v392
    %v511 = vpack.c.b16 %v395, %v393
    %v512 = vpack.c.b16 %v398, %v396
    %v513 = vpack.c.b16 %v399, %v397
    %v514 = vpack.c.b16 %v402, %v400
    %v515 = vpack.c.b16 %v403, %v401
    %v516 = vpack.c.b16 %v406, %v404
    %v517 = vpack.c.b16 %v407, %v405
    %v518 = vpack.c.b16 %v410, %v408
    %v519 = vpack.c.b16 %v411, %v409
    %v520 = vpack.c.b16 %v414, %v412
    %v521 = vpack.c.b16 %v415, %v413
    %v522 = vpack.c.b16 %v418, %v416
    %v523 = vpack.c.b16 %v419, %v417
    %v524 = vpack.c.b16 %v422, %v420
    %v525 = vpack.c.b16 %v423, %v421
    %v526 = vpack.c.b16 %v426, %v424
    %v527 = vpack.c.b16 %v427, %v425
    %v528 = vpack.c.b16 %v430, %v428
    %v529 = vpack.c.b16 %v431, %v429
    %v530 = vpack.c.b16 %v434, %v432
    %v531 = vpack.c.b16 %v435, %v433
    %v532 = vpack.c.b16 %v438, %v436
    %v533 = vpack.c.b16 %v439, %v437
    %v534 = vpack.c.b16 %v442, %v440
    %v535 = vpack.c.b16 %v443, %v441
    %v536 = vpack.c.b16 %v446, %v444
    %v537 = vpack.c.b16 %v447, %v445
    %v538 = vpack.c.b16 %v450, %v448
    %v539 = vpack.c.b16 %v451, %v449
    %v540 = vpack.c.b16 %v454, %v452
    %v541 = vpack.c.b16 %v455, %v453
    %v542 = vpack.c.b16 %v458, %v456
    %v543 = vpack.c.b16 %v459, %v457
    %v544 = vpack.c.b16 %v462, %v460
    %v545 = vpack.c.b16 %v463, %v461
    %v546 = vpack.c.b16 %v466, %v464
    %v547 = vpack.c.b16 %v467, %v465
    %v548 = vpack.c.b16 %v470, %v468
    %v549 = vpack.c.b16 %v471, %v469
    %v550 = vpack.c.b16 %v474, %v472
    %v551 = vpack.c.b16 %v475, %v473
    %v552 = vpack.c.b16 %v478, %v476
    %v553 = vpack.c.b16 %v479, %v477
    %v554 = vpack.c.b16 %v482, %v480
    %v555 = vpack.c.b16 %v483, %v481
    %v556 = vpack.c.b16 %v486, %v484
    %v557 = vpack.c.b16 %v487, %v485
    %v558 = vpack.c.b16 %v490, %v488
    %v559 = vpack.c.b16 %v491, %v489
    %v560 = vpack.c.b16 %v494, %v492
    %v561 = vpack.c.b16 %v495, %v493
    %v562 = vpack.c.b16 %v498, %v496
    %v563 = vpack.c.b16 %v499, %v497
    %628 = vmatpush.bf16.msra.mxu0 %v514
    %629 = vmatpush.bf16.msra.mxu0 %v512
    %630 = vmatpush.bf16.msra.mxu0 %v510
    %631 = vmatpush.bf16.msra.mxu0 %v508
    %632 = vmatpush.bf16.msra.mxu0 %v506
    %633 = vmatpush.bf16.msra.mxu0 %v504
    %634 = vmatpush.bf16.msra.mxu0 %v502
    %635 = vmatpush.bf16.msra.mxu0 %v500
    %636 = vmatmul.bf16.gmra.mxu0 %v234
    %v637 = vpop.f32.mrf.mxu0
    %v638 = vadd.f32 %v304, %v637
    %v639 = vpop.f32.mrf.mxu0
    %640 = vdwg.mxu0
    %641 = vmatpush.bf16.msra.mxu0 %v530
    %642 = vmatpush.bf16.msra.mxu0 %v528
    %643 = vmatpush.bf16.msra.mxu0 %v526
    %644 = vmatpush.bf16.msra.mxu0 %v524
    %645 = vmatpush.bf16.msra.mxu0 %v522
    %646 = vmatpush.bf16.msra.mxu0 %v520
    %647 = vmatpush.bf16.msra.mxu0 %v518
    %648 = vmatpush.bf16.msra.mxu0 %v516
    %649 = vmatmul.bf16.gmra.mxu0 %v235
    %v650 = vpop.f32.mrf.mxu0
    %v651 = vadd.f32 %v638, %v650
    %v652 = vpop.f32.mrf.mxu0
    %653 = vdwg.mxu0
    %654 = vmatpush.bf16.msra.mxu0 %v546
    %655 = vmatpush.bf16.msra.mxu0 %v544
    %656 = vmatpush.bf16.msra.mxu0 %v542
    %657 = vmatpush.bf16.msra.mxu0 %v540
    %658 = vmatpush.bf16.msra.mxu0 %v538
    %659 = vmatpush.bf16.msra.mxu0 %v536
    %660 = vmatpush.bf16.msra.mxu0 %v534
    %661 = vmatpush.bf16.msra.mxu0 %v532
    %662 = vmatmul.bf16.gmra.mxu0 %v236
    %v663 = vpop.f32.mrf.mxu0
    %v664 = vadd.f32 %v651, %v663
    %v665 = vpop.f32.mrf.mxu0
    %666 = vdwg.mxu0
    %667 = vmatpush.bf16.msra.mxu0 %v562
    %668 = vmatpush.bf16.msra.mxu0 %v560
    %669 = vmatpush.bf16.msra.mxu0 %v558
    %670 = vmatpush.bf16.msra.mxu0 %v556
    %671 = vmatpush.bf16.msra.mxu0 %v554
    %672 = vmatpush.bf16.msra.mxu0 %v552
    %673 = vmatpush.bf16.msra.mxu0 %v550
    %674 = vmatpush.bf16.msra.mxu0 %v548
    %675 = vmatmul.bf16.gmra.mxu0 %v237
    %v676 = vpop.f32.mrf.mxu0
    %v677 = vadd.f32 %v664, %v676
    %v678 = vpop.f32.mrf.mxu0
    %679 = vdwg.mxu0
    %680 = vmatpush.bf16.msra.mxu0 %v515
    %681 = vmatpush.bf16.msra.mxu0 %v513
    %682 = vmatpush.bf16.msra.mxu0 %v511
    %683 = vmatpush.bf16.msra.mxu0 %v509
    %684 = vmatpush.bf16.msra.mxu0 %v507
    %685 = vmatpush.bf16.msra.mxu0 %v505
    %686 = vmatpush.bf16.msra.mxu0 %v503
    %687 = vmatpush.bf16.msra.mxu0 %v501
    %688 = vmatmul.bf16.gmra.mxu0 %v234
    %v689 = vpop.f32.mrf.mxu0
    %v690 = vadd.f32 %v305, %v689
    %v691 = vpop.f32.mrf.mxu0
    %692 = vdwg.mxu0
    %693 = vmatpush.bf16.msra.mxu0 %v531
    %694 = vmatpush.bf16.msra.mxu0 %v529
    %695 = vmatpush.bf16.msra.mxu0 %v527
    %696 = vmatpush.bf16.msra.mxu0 %v525
    %697 = vmatpush.bf16.msra.mxu0 %v523
    %698 = vmatpush.bf16.msra.mxu0 %v521
    %699 = vmatpush.bf16.msra.mxu0 %v519
    %700 = vmatpush.bf16.msra.mxu0 %v517
    %701 = vmatmul.bf16.gmra.mxu0 %v235
    %v702 = vpop.f32.mrf.mxu0
    %v703 = vadd.f32 %v690, %v702
    %v704 = vpop.f32.mrf.mxu0
    %705 = vdwg.mxu0
    %706 = vmatpush.bf16.msra.mxu0 %v547
    %707 = vmatpush.bf16.msra.mxu0 %v545
    %708 = vmatpush.bf16.msra.mxu0 %v543
    %709 = vmatpush.bf16.msra.mxu0 %v541
    %710 = vmatpush.bf16.msra.mxu0 %v539
    %711 = vmatpush.bf16.msra.mxu0 %v537
    %712 = vmatpush.bf16.msra.mxu0 %v535
    %713 = vmatpush.bf16.msra.mxu0 %v533
    %714 = vmatmul.bf16.gmra.mxu0 %v236
    %v715 = vpop.f32.mrf.mxu0
    %v716 = vadd.f32 %v703, %v715
    %v717 = vpop.f32.mrf.mxu0
    %718 = vdwg.mxu0
    %719 = vmatpush.bf16.msra.mxu0 %v563
    %720 = vmatpush.bf16.msra.mxu0 %v561
    %721 = vmatpush.bf16.msra.mxu0 %v559
    %722 = vmatpush.bf16.msra.mxu0 %v557
    %723 = vmatpush.bf16.msra.mxu0 %v555
    %724 = vmatpush.bf16.msra.mxu0 %v553
    %725 = vmatpush.bf16.msra.mxu0 %v551
    %726 = vmatpush.bf16.msra.mxu0 %v549
    %727 = vmatmul.bf16.gmra.mxu0 %v237
    %v728 = vpop.f32.mrf.mxu0
    %v729 = vadd.f32 %v716, %v728
    %v730 = vpop.f32.mrf.mxu0
    %731 = vdwg.mxu0
    %vm732 = vcmp.gt.f32.partialorder %v677, 0.0
    %vm733 = vcmp.gt.f32.partialorder %v729, 0.0
    %v734 = vmul.f32 %v677, 0.2
    %v735 = vmul.f32 %v729, 0.2
    %v736 = vsel %vm732, %v677, %v734
    %v737 = vsel %vm733, %v729, %v735
    %v738 = vpack.c.bf16 %v736, %v736
    %v739 = vpack.c.bf16 %v737, %v737
    %v740 = vld [vmem:[%s5] sm:$0xf]
    %v741 = vld [vmem:[%s5 + $0x4] sm:$0xf]
    %v742 = vld [vmem:[%s5 + $0x8] sm:$0xf]
    %v743 = vld [vmem:[%s5 + $0xc] sm:$0xf]
    %v744 = vld [vmem:[%s5 + $0x10] sm:$0xf]
    %v745 = vld [vmem:[%s5 + $0x14] sm:$0xf]
    %v746 = vld [vmem:[%s5 + $0x18] sm:$0xf]
    %v747 = vld [vmem:[%s5 + $0x1c] sm:$0xf]
    %v748 = vld [vmem:[%s5 + $0x20] sm:$0xf]
    %v749 = vld [vmem:[%s5 + $0x24] sm:$0xf]
    %v750 = vld [vmem:[%s5 + $0x28] sm:$0xf]
    %v751 = vld [vmem:[%s5 + $0x2c] sm:$0xf]
    %v752 = vld [vmem:[%s5 + $0x30] sm:$0xf]
    %v753 = vld [vmem:[%s5 + $0x34] sm:$0xf]
    %v754 = vld [vmem:[%s5 + $0x38] sm:$0xf]
    %v755 = vld [vmem:[%s5 + $0x3c] sm:$0xf]
    %v756 = vld [vmem:[%s5 + $0x40] sm:$0xf]
    %v757 = vld [vmem:[%s5 + $0x44] sm:$0xf]
    %v758 = vld [vmem:[%s5 + $0x48] sm:$0xf]
    %v759 = vld [vmem:[%s5 + $0x4c] sm:$0xf]
    %v760 = vld [vmem:[%s5 + $0x50] sm:$0xf]
    %v761 = vld [vmem:[%s5 + $0x54] sm:$0xf]
    %v762 = vld [vmem:[%s5 + $0x58] sm:$0xf]
    %v763 = vld [vmem:[%s5 + $0x5c] sm:$0xf]
    %v764 = vld [vmem:[%s5 + $0x60] sm:$0xf]
    %v765 = vld [vmem:[%s5 + $0x64] sm:$0xf]
    %v766 = vld [vmem:[%s5 + $0x68] sm:$0xf]
    %v767 = vld [vmem:[%s5 + $0x6c] sm:$0xf]
    %v768 = vld [vmem:[%s5 + $0x70] sm:$0xf]
    %v769 = vld [vmem:[%s5 + $0x74] sm:$0xf]
    %v770 = vld [vmem:[%s5 + $0x78] sm:$0xf]
    %v771 = vld [vmem:[%s5 + $0x7c] sm:$0xf]
    %v772 = vld [vmem:[%s6] sm:$0x1]
    %v774 = vperm.slane %v772, 0
    %v808 = vunpack.c.l.b16 %v740
    %v809 = vunpack.c.l.b16 %v741
    %v810 = vunpack.c.l.b16 %v742
    %v811 = vunpack.c.l.b16 %v743
    %v812 = vunpack.c.l.b16 %v744
    %v813 = vunpack.c.l.b16 %v745
    %v814 = vunpack.c.l.b16 %v746
    %v815 = vunpack.c.l.b16 %v747
    %v816 = vunpack.c.l.b16 %v748
    %v817 = vunpack.c.l.b16 %v749
    %v818 = vunpack.c.l.b16 %v750
    %v819 = vunpack.c.l.b16 %v751
    %v820 = vunpack.c.l.b16 %v752
    %v821 = vunpack.c.l.b16 %v753
    %v822 = vunpack.c.l.b16 %v754
    %v823 = vunpack.c.l.b16 %v755
    %v824 = vunpack.c.l.b16 %v756
    %v825 = vunpack.c.l.b16 %v757
    %v826 = vunpack.c.l.b16 %v758
    %v827 = vunpack.c.l.b16 %v759
    %v828 = vunpack.c.l.b16 %v760
    %v829 = vunpack.c.l.b16 %v761
    %v830 = vunpack.c.l.b16 %v762
    %v831 = vunpack.c.l.b16 %v763
    %v832 = vunpack.c.l.b16 %v764
    %v833 = vunpack.c.l.b16 %v765
    %v834 = vunpack.c.l.b16 %v766
    %v835 = vunpack.c.l.b16 %v767
    %v836 = vunpack.c.l.b16 %v768
    %v837 = vunpack.c.l.b16 %v769
    %v838 = vunpack.c.l.b16 %v770
    %v839 = vunpack.c.l.b16 %v771
    %v840 = vpack.c.b16 %v809, %v808
    %v841 = vpack.c.b16 %v811, %v810
    %v842 = vpack.c.b16 %v813, %v812
    %v843 = vpack.c.b16 %v815, %v814
    %v844 = vpack.c.b16 %v817, %v816
    %v845 = vpack.c.b16 %v819, %v818
    %v846 = vpack.c.b16 %v821, %v820
    %v847 = vpack.c.b16 %v823, %v822
    %v848 = vpack.c.b16 %v825, %v824
    %v849 = vpack.c.b16 %v827, %v826
    %v850 = vpack.c.b16 %v829, %v828
    %v851 = vpack.c.b16 %v831, %v830
    %v852 = vpack.c.b16 %v833, %v832
    %v853 = vpack.c.b16 %v835, %v834
    %v854 = vpack.c.b16 %v837, %v836
    %v855 = vpack.c.b16 %v839, %v838
    %872 = vmatpush.bf16.msra.mxu0 %v847
    %873 = vmatpush.bf16.msra.mxu0 %v846
    %874 = vmatpush.bf16.msra.mxu0 %v845
    %875 = vmatpush.bf16.msra.mxu0 %v844
    %876 = vmatpush.bf16.msra.mxu0 %v843
    %877 = vmatpush.bf16.msra.mxu0 %v842
    %878 = vmatpush.bf16.msra.mxu0 %v841
    %879 = vmatpush.bf16.msra.mxu0 %v840
    %880 = vmatmul.bf16.gmra.mxu0 %v738
    %v881 = vpop.f32.mrf.mxu0
    %v882 = vadd.f32 %v774, %v881
    %v883 = vpop.f32.mrf.mxu0
    %884 = vdwg.mxu0
    %885 = vmatpush.bf16.msra.mxu0 %v855
    %886 = vmatpush.bf16.msra.mxu0 %v854
    %887 = vmatpush.bf16.msra.mxu0 %v853
    %888 = vmatpush.bf16.msra.mxu0 %v852
    %889 = vmatpush.bf16.msra.mxu0 %v851
    %890 = vmatpush.bf16.msra.mxu0 %v850
    %891 = vmatpush.bf16.msra.mxu0 %v849
    %892 = vmatpush.bf16.msra.mxu0 %v848
    %893 = vmatmul.bf16.gmra.mxu0 %v739
    %v894 = vpop.f32.mrf.mxu0
    %v895 = vadd.f32 %v882, %v894
    %v896 = vpop.f32.mrf.mxu0
    %897 = vdwg.mxu0
    %v898 = vand.u32 2147483647, %v895
    %v899 = vsub.f32 0.0, %v898
    %v900 = vmul.f32 %v899, 1.442695
    %v901 = vpow.pop %v900
    %vm902 = vcmp.ge.f32.partialorder %v895, 0.0
    %v903 = vsel %vm902, 1.0, %v901
    %v904 = vadd.f32 %v901, 1.0
    %v905 = vrcp.pop %v904
    %v906 = vmul.f32 %v904, %v905
    %v907 = vsub.f32 1.0, %v906
    %v908 = vmul.f32 %v905, %v907
    %v909 = vadd.f32 %v905, %v908
    %vm910 = vweird.f32 %v904
    %vm911 = vweird.f32 %v905
    %vm912 = vmor %vm910, %vm911
    %v913 = vsel %vm912, %v905, %v909
    %v914 = vand.u32 2147483647, %v904
    %vm915 = vcmp.eq.f32.partialorder %v914, 8.507059e+37
    %v916 = vand.u32 %v904, 2147483648
    %v917 = vor.u32 1.1754944e-38, %v916
    %v918 = vsel %vm915, %v917, %v913
    %v919 = vmul.f32 %v903, %v918
    %vm920 = vcmask 64512
    %921 = vst.msk [vmem:[#allocation7] sm:$0xff] %vm920, %v919
    // Predicated region
    $region38: #{tpu_custom_call.1} parent=1 // pred_check
      _
    $region39: #{tpu_custom_call.1} parent=1 // pred_check_branch
      %923 = sbr.rel (0) target = $region41
    $region40: #{tpu_custom_call.1} parent=1 // pred_region
      %925 = vsyncadd [#allocation4], 0
      %s927 = sshll.u32 [#allocation7], 4
      %s928 = int_to_ptr.vmem [resolvable:$true] %s927
      %s929 = sshll.u32 %s7, 4
      %s930 = int_to_ptr.hbm [resolvable:$true] %s929
      %932 = dma.vmem_to_hbm [thread:$0]  %s928, 128, %s930, [#allocation4]
    $region41: #{tpu_custom_call.1} parent=1 // pred_fallthru
      _
    // Predicated region
    $region42: #{tpu_custom_call.1} parent=1 // pred_check
      _
    $region43: #{tpu_custom_call.1} parent=1 // pred_check_branch
      %934 = sbr.rel (0) target = $region45
    $region44: #{tpu_custom_call.1} parent=1 // pred_region
      %936 = dma.done [#allocation4], 128
    $region45: #{tpu_custom_call.1} parent=1 // pred_fallthru
      _
    %937 = vsyncpa [#allocation3], 1
    %938 = vsyncpa [#allocation6], 1
    %939 = vsyncpa [#allocation4], 1

</llo_original>
